<compile_context>
chip_gen: v6e
topology: v6e:2x2x1
jax: 0.10.0
libtpu: 0.0.40
codegen_flags: <defaults>
</compile_context>

<pallas_src>
import functools

import jax
import jax.numpy as jnp
from jax.experimental import pallas as pl
from jax.experimental.pallas import tpu as pltpu

_LANES = 128
_SUBLANES = 8
_CHUNK = _SUBLANES * _LANES            # 1024 elements = one (8,128) f32 vreg
_BLOCK_ROWS = 8192                     # (8192,128) f32 tile = 4 MiB / stream / buffer
_VMEM_LIMIT = 32 * 1024 * 1024         # explicit scoped VMEM (v5e default is 16 MiB)


def _bce_elementwise(x, t, logits):
    """Per-element binary cross entropy, matching torch semantics."""
    if logits:
        # F.binary_cross_entropy_with_logits (numerically stable form)
        return jnp.maximum(x, 0.0) - x * t + jnp.log1p(jnp.exp(-jnp.abs(x)))
    # F.binary_cross_entropy clamps log terms at -100 (torch behaviour)
    log_p = jnp.maximum(jnp.log(x), -100.0)
    log_1mp = jnp.maximum(jnp.log(1.0 - x), -100.0)
    return -(t * log_p + (1.0 - t) * log_1mp)


def _focal_weight(pt, gamma):
    """(1 - pt) ** gamma, with integer-gamma fast path and clamp against NaN."""
    w = jnp.maximum(1.0 - pt, 0.0)
    g = float(gamma)
    if g == 0.0:
        return jnp.ones_like(w)
    if g.is_integer() and 1.0 <= g <= 8.0:
        out = w
        for _ in range(int(g) - 1):
            out = out * w
        return out
    return w ** jnp.float32(g)


def _focal_elementwise(x, t, *, alpha, gamma, logits):
    """alpha=None -> alpha is hoisted out (applied by the caller)."""
    bce = _bce_elementwise(x, t, logits)
    pt = jnp.exp(-bce)
    fl = _focal_weight(pt, gamma) * bce
    if alpha is not None and float(alpha) != 1.0:
        fl = jnp.float32(alpha) * fl
    return fl


def _focal_sum_kernel(x_ref, t_ref, out_ref, acc_ref, *,
                      gamma, logits, rows_total, block_rows, bps, need_mask):
    """Gridded focal loss, unscaled partial sum per shard -> SMEM scalar."""
    c = pl.program_id(0)     # shard (parallel axis; 2 TensorCores on v7x)
    i = pl.program_id(1)     # block within shard (arbitrary / carried axis)

    @pl.when(i == 0)
    def _():
        acc_ref[...] = jnp.zeros_like(acc_ref)

    x = x_ref[...].astype(jnp.float32)
    t = t_ref[...].astype(jnp.float32)
    # alpha hoisted: per-element path is (1-pt)^gamma * bce only
    f_loss = _focal_elementwise(x, t, alpha=None, gamma=gamma, logits=logits)

    if need_mask:
        block_start = (c * bps + i) * block_rows       # intended global row start
        has_invalid = block_start + block_rows > rows_total

        @pl.when(jnp.logical_not(has_invalid))
        def _():
            acc_ref[...] += f_loss.reshape(-1, _SUBLANES, _LANES).sum(axis=0)

        @pl.when(has_invalid)
        def _():
            # Row-level validity (single int32 iota + compare); select (not
            # multiply) so garbage/NaN from out-of-range rows is dropped.
            row = jax.lax.broadcasted_iota(jnp.int32, f_loss.shape, 0)
            fm = jnp.where(block_start + row < rows_total, f_loss, 0.0)
            acc_ref[...] += fm.reshape(-1, _SUBLANES, _LANES).sum(axis=0)
    else:
        acc_ref[...] += f_loss.reshape(-1, _SUBLANES, _LANES).sum(axis=0)

    @pl.when(i == bps - 1)
    def _():
        out_ref[0, 0] = jnp.sum(acc_ref[...])


def _focal_elem_kernel(x_ref, t_ref, o_ref, *, alpha, gamma, logits):
    """Gridded focal loss, no reduction -> elementwise slab."""
    x = x_ref[...].astype(jnp.float32)
    t = t_ref[...].astype(jnp.float32)
    f_loss = _focal_elementwise(x, t, alpha=alpha, gamma=gamma, logits=logits)
    o_ref[...] = f_loss.astype(o_ref.dtype)


def focal_loss(inputs, targets, *, alpha=1.0, gamma=2.0, logits=False,
               reduce=True, block_rows=None):
    """JAX/Pallas equivalent of FocalLoss.forward."""
    orig_shape = inputs.shape
    orig_dtype = inputs.dtype
    n_valid = inputs.size

    flat_x = inputs.reshape(-1)          # native dtype: no wrapper upcast
    flat_t = targets.reshape(-1)

    # Aligned bulk (multiple of 8*128) goes through the kernel; the <1024
    # element tail (if any) is computed with plain jnp -- no jnp.pad copies.
    n_bulk = (n_valid // _CHUNK) * _CHUNK
    n_tail = n_valid - n_bulk

    if reduce:
        tail_sum = jnp.float32(0.0)
        if n_tail:
            tail_fl = _focal_elementwise(
                flat_x[n_bulk:].astype(jnp.float32),
                flat_t[n_bulk:].astype(jnp.float32),
                alpha=None, gamma=gamma, logits=logits)
            tail_sum = jnp.sum(tail_fl, dtype=jnp.float32)

        if n_bulk == 0:
            total = tail_sum
        else:
            rows = n_bulk // _LANES                       # multiple of 8
            x2 = flat_x[:n_bulk].reshape(rows, _LANES)
            t2 = flat_t[:n_bulk].reshape(rows, _LANES)

            blk = min(block_rows or _BLOCK_ROWS, rows)    # multiple of 8
            num_blocks = pl.cdiv(rows, blk)
            n_shards = 2 if num_blocks >= 2 else 1        # 2 TCs on v7x
            bps = pl.cdiv(num_blocks, n_shards)           # blocks per shard
            need_mask = (n_shards * bps * blk) != rows
            has_oob_block = (n_shards * bps) > num_blocks

            if has_oob_block:
                # Clamp intended block index into range; masked to 0 in-kernel.
                idx = lambda c, i: (jnp.minimum(c * bps + i, num_blocks - 1), 0)
            else:
                idx = lambda c, i: (c * bps + i, 0)

            kernel = functools.partial(
                _focal_sum_kernel,
                gamma=float(gamma), logits=bool(logits),
                rows_total=rows, block_rows=blk, bps=bps, need_mask=need_mask,
            )
            partials = pl.pallas_call(
                kernel,
                out_shape=jax.ShapeDtypeStruct((n_shards, 1), jnp.float32),
                grid=(n_shards, bps),
                in_specs=[pl.BlockSpec((blk, _LANES), idx),
                          pl.BlockSpec((blk, _LANES), idx)],
                out_specs=pl.BlockSpec((1, 1), lambda c, i: (c, 0),
                                       memory_space=pltpu.SMEM),
                scratch_shapes=[pltpu.VMEM((_SUBLANES, _LANES), jnp.float32)],
                compiler_params=pltpu.CompilerParams(
                    dimension_semantics=("parallel", "arbitrary"),
                    vmem_limit_bytes=_VMEM_LIMIT),
            )(x2, t2)
            total = jnp.sum(partials) + tail_sum

        # alpha and mean hoisted out of the per-element path.
        scale = float(alpha) / float(n_valid)
        return total * jnp.float32(scale)

    # ---------------- reduce=False (elementwise output) ----------------
    parts = []
    if n_bulk:
        rows = n_bulk // _LANES
        x2 = flat_x[:n_bulk].reshape(rows, _LANES)
        t2 = flat_t[:n_bulk].reshape(rows, _LANES)

        blk = min(block_rows or _BLOCK_ROWS, rows)
        num_blocks = pl.cdiv(rows, blk)

        kernel = functools.partial(
            _focal_elem_kernel,
            alpha=float(alpha), gamma=float(gamma), logits=bool(logits),
        )
        bulk_out = pl.pallas_call(
            kernel,
            out_shape=jax.ShapeDtypeStruct((rows, _LANES), orig_dtype),
            grid=(num_blocks,),
            in_specs=[pl.BlockSpec((blk, _LANES), lambda i: (i, 0)),
                      pl.BlockSpec((blk, _LANES), lambda i: (i, 0))],
            out_specs=pl.BlockSpec((blk, _LANES), lambda i: (i, 0)),
            compiler_params=pltpu.CompilerParams(
                dimension_semantics=("parallel",),
                vmem_limit_bytes=_VMEM_LIMIT),
        )(x2, t2)
        parts.append(bulk_out.reshape(-1))
    if n_tail:
        tail_fl = _focal_elementwise(
            flat_x[n_bulk:].astype(jnp.float32),
            flat_t[n_bulk:].astype(jnp.float32),
            alpha=float(alpha), gamma=gamma, logits=logits)
        parts.append(tail_fl.astype(orig_dtype))

    out = parts[0] if len(parts) == 1 else jnp.concatenate(parts)
    return out.reshape(orig_shape)


def _focal_loss_ref(inputs, targets, *, alpha=1.0, gamma=2.0, logits=False, reduce=True):
    bce = _bce_elementwise(inputs.astype(jnp.float32),
                           targets.astype(jnp.float32), logits)
    pt = jnp.exp(-bce)
    fl = alpha * (1.0 - pt) ** gamma * bce
    return jnp.mean(fl) if reduce else fl


if __name__ == "__main__":
    key = jax.random.PRNGKey(0)
    k1, k2, k3 = jax.random.split(key, 3)

    # small shapes consistent with a typical segmentation-style usage: N,C,H,W
    shape = (2, 4, 16, 16)
    # logits=False (module default) => inputs are probabilities in (0, 1)
    inputs = jax.random.uniform(k1, shape, jnp.float32, minval=0.01, maxval=0.99)
    targets = jax.random.bernoulli(k2, 0.5, shape).astype(jnp.float32)

    # default path: alpha=1, gamma=2, logits=False, reduce=True
    out = jax.block_until_ready(focal_loss(inputs, targets))
    ref = _focal_loss_ref(inputs, targets)
    assert jnp.allclose(out, ref, rtol=1e-4, atol=1e-6), (out, ref)

    # reduce=False path
    elem = jax.block_until_ready(focal_loss(inputs, targets, reduce=False))
    elem_ref = _focal_loss_ref(inputs, targets, reduce=False)
    assert elem.shape == shape
    assert jnp.allclose(elem, elem_ref, rtol=1e-4, atol=1e-6)

    # logits=True path
    logit_in = jax.random.normal(k3, shape, jnp.float32)
    out_l = jax.block_until_ready(focal_loss(logit_in, targets, logits=True))
    ref_l = _focal_loss_ref(logit_in, targets, logits=True)
    assert jnp.allclose(out_l, ref_l, rtol=1e-4, atol=1e-6), (out_l, ref_l)

    # ragged size -> aligned-bulk kernel + plain-jnp tail (no jnp.pad copies),
    # non-default alpha/gamma
    rshape = (5, 7, 31)   # 1085 = 1024 bulk + 61 tail
    rin = jax.random.uniform(k1, rshape, jnp.float32, minval=0.01, maxval=0.99)
    rtg = jax.random.bernoulli(k2, 0.5, rshape).astype(jnp.float32)
    rout = jax.block_until_ready(focal_loss(rin, rtg, alpha=0.25, gamma=3.0))
    rref = _focal_loss_ref(rin, rtg, alpha=0.25, gamma=3.0)
    assert jnp.allclose(rout, rref, rtol=1e-4, atol=1e-6), (rout, rref)
    relem = jax.block_until_ready(focal_loss(rin, rtg, reduce=False))
    assert jnp.allclose(relem, _focal_loss_ref(rin, rtg, reduce=False),
                        rtol=1e-4, atol=1e-6)

    # multi-block + partial last block + 2-shard reduce path (forced small tiles):
    # 5120 elems -> 40 rows, block_rows=16 -> 3 blocks, 2 shards, clamped OOB block
    mshape = (2, 4, 16, 40)
    m_in = jax.random.uniform(k3, mshape, jnp.float32, minval=0.01, maxval=0.99)
    m_tg = jax.random.bernoulli(k2, 0.5, mshape).astype(jnp.float32)
    mout = jax.block_until_ready(focal_loss(m_in, m_tg, block_rows=16))
    mref = _focal_loss_ref(m_in, m_tg)
    assert jnp.allclose(mout, mref, rtol=1e-4, atol=1e-6), (mout, mref)
    melem = jax.block_until_ready(focal_loss(m_in, m_tg, reduce=False, block_rows=16))
    assert jnp.allclose(melem, _focal_loss_ref(m_in, m_tg, reduce=False),
                        rtol=1e-4, atol=1e-6)

    print("KERNEL_OK")
</pallas_src>

<mosaic_0001>
module attributes {stable_mosaic.version = 11 : i64} {
  func.func @_focal_sum_kernel(%arg0: i32, %arg1: i32, %arg2: memref<16x128xf32, #tpu.memory_space<vmem>>, %arg3: memref<16x128xf32, #tpu.memory_space<vmem>>, %arg4: memref<1x1xf32, #tpu.memory_space<smem>>, %arg5: memref<8x128xf32, #tpu.memory_space<vmem>>) attributes {dimension_semantics = [#tpu.dimension_semantics<parallel>, #tpu.dimension_semantics<arbitrary>], iteration_bounds = array<i64: 1, 1>, scalar_prefetch = 0 : i64, scratch_operands = 1 : i64, tpu.core_type = #tpu.core_type<tc>, window_params = [{transform_indices = @transform_0, window_bounds = array<i64: 16, 128>}, {transform_indices = @transform_1, window_bounds = array<i64: 16, 128>}, {transform_indices = @transform_2, window_bounds = array<i64: 1, 1>}]} {
    %c0_i32 = arith.constant 0 : i32
    %0 = arith.cmpi eq, %arg1, %c0_i32 : i32
    %1 = arith.extui %0 : i1 to i32
    %c0_i32_0 = arith.constant 0 : i32
    %2 = arith.cmpi ne, %1, %c0_i32_0 : i32
    scf.if %2 {
      %cst_18 = arith.constant 0.000000e+00 : f32
      %37 = vector.broadcast %cst_18 : f32 to vector<8x128xf32>
      %c0_19 = arith.constant 0 : index
      %c0_20 = arith.constant 0 : index
      %38 = vector.load %arg5[%c0_19, %c0_20] : memref<8x128xf32, #tpu.memory_space<vmem>>, vector<8x128xf32>
      tpu.vector_store %arg5[%c0_19, %c0_20], %37 {strides = array<i32>} : memref<8x128xf32, #tpu.memory_space<vmem>>, vector<8x128xf32>,
    } else {
    }
    %c0 = arith.constant 0 : index
    %c0_1 = arith.constant 0 : index
    %3 = vector.load %arg2[%c0, %c0_1] : memref<16x128xf32, #tpu.memory_space<vmem>>, vector<16x128xf32>
    %c0_2 = arith.constant 0 : index
    %c0_3 = arith.constant 0 : index
    %4 = vector.load %arg3[%c0_2, %c0_3] : memref<16x128xf32, #tpu.memory_space<vmem>>, vector<16x128xf32>
    %5 = math.log %3 : vector<16x128xf32>
    %cst = arith.constant -1.000000e+02 : f32
    %6 = vector.broadcast %cst : f32 to vector<16x128xf32>
    %7 = arith.maximumf %5, %6 : vector<16x128xf32>
    %cst_4 = arith.constant 1.000000e+00 : f32
    %8 = vector.broadcast %cst_4 : f32 to vector<16x128xf32>
    %9 = arith.subf %8, %3 : vector<16x128xf32>
    %10 = math.log %9 : vector<16x128xf32>
    %cst_5 = arith.constant -1.000000e+02 : f32
    %11 = vector.broadcast %cst_5 : f32 to vector<16x128xf32>
    %12 = arith.maximumf %10, %11 : vector<16x128xf32>
    %13 = arith.mulf %4, %7 : vector<16x128xf32>
    %cst_6 = arith.constant 1.000000e+00 : f32
    %14 = vector.broadcast %cst_6 : f32 to vector<16x128xf32>
    %15 = arith.subf %14, %4 : vector<16x128xf32>
    %16 = arith.mulf %15, %12 : vector<16x128xf32>
    %17 = arith.addf %13, %16 : vector<16x128xf32>
    %cst_7 = arith.constant 0.000000e+00 : f32
    %18 = vector.broadcast %cst_7 : f32 to vector<16x128xf32>
    %19 = arith.subf %18, %17 : vector<16x128xf32>
    %cst_8 = arith.constant 0.000000e+00 : f32
    %20 = vector.broadcast %cst_8 : f32 to vector<16x128xf32>
    %21 = arith.subf %20, %19 : vector<16x128xf32>
    %22 = math.exp %21 : vector<16x128xf32>
    %cst_9 = arith.constant 1.000000e+00 : f32
    %23 = vector.broadcast %cst_9 : f32 to vector<16x128xf32>
    %24 = arith.subf %23, %22 : vector<16x128xf32>
    %cst_10 = arith.constant 0.000000e+00 : f32
    %25 = vector.broadcast %cst_10 : f32 to vector<16x128xf32>
    %26 = arith.maximumf %24, %25 : vector<16x128xf32>
    %27 = arith.mulf %26, %26 : vector<16x128xf32>
    %28 = arith.mulf %27, %19 : vector<16x128xf32>
    %c0_11 = arith.constant 0 : index
    %c0_12 = arith.constant 0 : index
    %29 = vector.load %arg5[%c0_11, %c0_12] : memref<8x128xf32, #tpu.memory_space<vmem>>, vector<8x128xf32>
    %30 = vector.shape_cast %28 : vector<16x128xf32> to vector<2x8x128xf32>
    %cst_13 = arith.constant dense<0.000000e+00> : vector<8x128xf32>
    %31 = vector.multi_reduction <add>, %30, %cst_13 [0] : vector<2x8x128xf32> to vector<8x128xf32>
    %32 = arith.addf %29, %31 : vector<8x128xf32>
    %c0_14 = arith.constant 0 : index
    %c0_15 = arith.constant 0 : index
    %33 = vector.load %arg5[%c0_14, %c0_15] : memref<8x128xf32, #tpu.memory_space<vmem>>, vector<8x128xf32>
    tpu.vector_store %arg5[%c0_14, %c0_15], %32 {strides = array<i32>} : memref<8x128xf32, #tpu.memory_space<vmem>>, vector<8x128xf32>,
    %c0_i32_16 = arith.constant 0 : i32
    %34 = arith.cmpi eq, %arg1, %c0_i32_16 : i32
    %35 = arith.extui %34 : i1 to i32
    %c0_i32_17 = arith.constant 0 : i32
    %36 = arith.cmpi ne, %35, %c0_i32_17 : i32
    scf.if %36 {
      %c0_18 = arith.constant 0 : index
      %c0_19 = arith.constant 0 : index
      %37 = vector.load %arg5[%c0_18, %c0_19] : memref<8x128xf32, #tpu.memory_space<vmem>>, vector<8x128xf32>
      %38 = vector.shape_cast %37 : vector<8x128xf32> to vector<1x8x128xf32>
      %cst_20 = arith.constant dense<0.000000e+00> : vector<1xf32>
      %39 = vector.multi_reduction <add>, %38, %cst_20 [1, 2] : vector<1x8x128xf32> to vector<1xf32>
      %40 = vector.shape_cast %39 : vector<1xf32> to vector<1x1x1xf32>
      %41 = vector.extract %40[0, 0, 0] : f32 from vector<1x1x1xf32>
      %c0_21 = arith.constant 0 : index
      %c0_22 = arith.constant 0 : index
      %42 = memref.load %arg4[%c0_21, %c0_22] : memref<1x1xf32, #tpu.memory_space<smem>>
      memref.store %41, %arg4[%c0_21, %c0_22] : memref<1x1xf32, #tpu.memory_space<smem>>
    } else {
    }
    return
  }
  func.func @transform_0(%arg0: i32, %arg1: i32) -> (i32, i32) {
    %c1_i32 = arith.constant 1 : i32
    %0 = arith.muli %arg0, %c1_i32 : i32
    %1 = arith.addi %0, %arg1 : i32
    %c0_i32 = arith.constant 0 : i32
    %c0_i32_0 = arith.constant 0 : i32
    return %1, %c0_i32 : i32, i32
  }
  func.func @transform_1(%arg0: i32, %arg1: i32) -> (i32, i32) {
    %c1_i32 = arith.constant 1 : i32
    %0 = arith.muli %arg0, %c1_i32 : i32
    %1 = arith.addi %0, %arg1 : i32
    %c0_i32 = arith.constant 0 : i32
    %c0_i32_0 = arith.constant 0 : i32
    return %1, %c0_i32 : i32, i32
  }
  func.func @transform_2(%arg0: i32, %arg1: i32) -> (i32, i32) {
    %c0_i32 = arith.constant 0 : i32
    %c0_i32_0 = arith.constant 0 : i32
    return %arg0, %c0_i32 : i32, i32
  }
}

</mosaic_0001>

<llo_original>
// kernel: tpu_custom_call.1
$region0: #{tpu_custom_call.1}
  #allocation0 [shape = 'u32[]', space=smem, size = 0x4, offset = 0x4, fixed_abs, tag = 'smem constant byte address 0x4 - core index']
  #allocation1 [shape = 'u32[144,128]{1,0:T(1,128)}', space=vmem, size = 0x12000, scoped, tag = 'internal scratch']
  #allocation2 [shape = 'f32[8,128]{1,0:T(8,128)}', space=vmem, size = 0x1000, scoped, tag = 'scratch operand']
  %s0 = inlined_call_operand.hbm [shape: f32[16,128], index: 0, kind: input, shape index: {}]
  %s1 = inlined_call_operand.hbm [shape: f32[16,128], index: 1, kind: input, shape index: {}]
  %s2 = inlined_call_operand.hbm [shape: f32[1,1], index: 2, kind: output, shape index: {}]
  %s3 = sld [smem:[#allocation0]]
  $region34: #{tpu_custom_call.1} parent=0
    _
  %s5 = ssub.s32 1, %s3
  %s6 = scalar_select 0, %s5, %s3
  $region1: #{tpu_custom_call.1} parent=0
    #allocation3 [shape = 'u8[8192]{0}', space=vmem, size = 0x2000, scoped, tag = 'input window, operand 0, single buffered']
    #allocation4 [shape = 's32[1]{0}', space=sflag, size = 0x4, scoped, tag = 'scoped memory for tpu_custom_call.1']
    #allocation5 [shape = 's32[1]{0}', space=sflag, size = 0x4, scoped, tag = 'scoped memory for tpu_custom_call.1']
    #allocation6 [shape = 'u8[8192]{0}', space=vmem, size = 0x2000, scoped, tag = 'input window, operand 1, single buffered']
    #allocation7 [shape = 's32[1]{0}', space=sflag, size = 0x4, scoped, tag = 'scoped memory for tpu_custom_call.1']
    #allocation8 [shape = 'u8[512]{0}', space=smem, size = 0x200, scoped, tag = 'output window, operand 0, single buffered']
    %7 = vsyncpa [#allocation4], 0
    %8 = vsyncpa [#allocation7], 0
    %9 = vsyncpa [#allocation5], 0
    // Predicated region
    $region2: #{tpu_custom_call.1} parent=1 // pred_check
      _
    $region3: #{tpu_custom_call.1} parent=1 // pred_check_branch
      %11 = sbr.rel (0) target = $region5
    $region4: #{tpu_custom_call.1} parent=1 // pred_region
      %s12 = sadd.s32 0, 0
      %s13 = smul.u32 2, %s12
      %s15 = ssub.s32 256, 256
      %16 = vsyncadd [#allocation4], %s15
      %s17 = smul.addr %s13, 128
      %s18 = scalar_lea.hbm %s0, %s17
      %s19 = sshll.u32 [#allocation3], 4
      %s20 = int_to_ptr.vmem [resolvable:$true] %s19
      %25 = dma.hbm_to_vmem [thread:$0]  %s18, 256, %s20, [#allocation4], 128, 128, 8
    $region5: #{tpu_custom_call.1} parent=1 // pred_fallthru
      _
    // Predicated region
    $region6: #{tpu_custom_call.1} parent=1 // pred_check
      _
    $region7: #{tpu_custom_call.1} parent=1 // pred_check_branch
      %27 = sbr.rel (0) target = $region9
    $region8: #{tpu_custom_call.1} parent=1 // pred_region
      %s28 = sadd.s32 0, 0
      %s29 = smul.u32 2, %s28
      %s31 = ssub.s32 256, 256
      %32 = vsyncadd [#allocation7], %s31
      %s33 = smul.addr %s29, 128
      %s34 = scalar_lea.hbm %s1, %s33
      %s35 = sshll.u32 [#allocation6], 4
      %s36 = int_to_ptr.vmem [resolvable:$true] %s35
      %41 = dma.hbm_to_vmem [thread:$0]  %s34, 256, %s36, [#allocation7], 128, 128, 8
    $region9: #{tpu_custom_call.1} parent=1 // pred_fallthru
      _
    // Predicated region
    $region10: #{tpu_custom_call.1} parent=1 // pred_check
      _
    $region11: #{tpu_custom_call.1} parent=1 // pred_check_branch
      %43 = sbr.rel (0) target = $region13
    $region12: #{tpu_custom_call.1} parent=1 // pred_region
      %44 = dma.done [#allocation4], 256
    $region13: #{tpu_custom_call.1} parent=1 // pred_fallthru
      _
    // Predicated region
    $region14: #{tpu_custom_call.1} parent=1 // pred_check
      _
    $region15: #{tpu_custom_call.1} parent=1 // pred_check_branch
      %46 = sbr.rel (0) target = $region17
    $region16: #{tpu_custom_call.1} parent=1 // pred_region
      %47 = dma.done [#allocation7], 256
    $region17: #{tpu_custom_call.1} parent=1 // pred_fallthru
      _
    %s48 = sadd.s32 0, 0
    %s49 = smul.u32 2, %s48
    %s50 = sadd.s32 0, 0
    %s51 = smul.u32 2, %s50
    %p52 = scmp.eq.s32.totalorder 0, 0
    // Predicated region
    $region18: #{tpu_custom_call.1} parent=1 // pred_check
      %p53 = pneg %p52
    $region19: #{tpu_custom_call.1} parent=1 // pred_check_branch
      %55 = sbr.rel (%p53) target = $region21
    $region20: #{tpu_custom_call.1} parent=1 // pred_region
      %56 = vst [vmem:[#allocation2] sm:$0xff] 0.0
    $region21: #{tpu_custom_call.1} parent=1 // pred_fallthru
      _
    %v57 = vld [vmem:[#allocation3] sm:$0xff]
    %v58 = vld [vmem:[#allocation3 + $0x8] sm:$0xff]
    %v59 = vld [vmem:[#allocation6] sm:$0xff]
    %v60 = vld [vmem:[#allocation6 + $0x8] sm:$0xff]
    %v61 = vlog2.pop %v57
    %v62 = vmul.f32 %v61, 0.6931472
    %v63 = vlog2.pop %v58
    %v64 = vmul.f32 %v63, 0.6931472
    %v65 = vmax.f32 %v62, -100.0
    %v66 = vmax.f32 %v64, -100.0
    %v67 = vsub.f32 1.0, %v57
    %v68 = vsub.f32 1.0, %v58
    %v69 = vlog2.pop %v67
    %v70 = vmul.f32 %v69, 0.6931472
    %v71 = vlog2.pop %v68
    %v72 = vmul.f32 %v71, 0.6931472
    %v73 = vmax.f32 %v70, -100.0
    %v74 = vmax.f32 %v72, -100.0
    %v75 = vmul.f32 %v59, %v65
    %v76 = vmul.f32 %v60, %v66
    %v77 = vsub.f32 1.0, %v59
    %v78 = vsub.f32 1.0, %v60
    %v79 = vmul.f32 %v77, %v73
    %v80 = vmul.f32 %v78, %v74
    %v81 = vadd.f32 %v75, %v79
    %v82 = vadd.f32 %v76, %v80
    %v83 = vsub.f32 0.0, %v81
    %v84 = vsub.f32 0.0, %v82
    %v85 = vsub.f32 0.0, %v83
    %v86 = vsub.f32 0.0, %v84
    %v87 = vmul.f32 %v85, 1.442695
    %v88 = vpow.pop %v87
    %v89 = vmul.f32 %v86, 1.442695
    %v90 = vpow.pop %v89
    %v91 = vsub.f32 1.0, %v88
    %v92 = vsub.f32 1.0, %v90
    %v93 = vmax.f32 %v91, 0.0
    %v94 = vmax.f32 %v92, 0.0
    %v95 = vmul.f32 %v93, %v93
    %v96 = vmul.f32 %v94, %v94
    %v97 = vmul.f32 %v95, %v83
    %v98 = vmul.f32 %v96, %v84
    %v99 = vld [vmem:[#allocation2] sm:$0xff]
    %v100 = vadd.f32 %v97, %v98
    %v101 = vadd.f32 %v99, %v100
    %102 = vst [vmem:[#allocation2] sm:$0xff] %v101
    // Predicated region
    $region22: #{tpu_custom_call.1} parent=1 // pred_check
      %p103 = pneg %p52
    $region23: #{tpu_custom_call.1} parent=1 // pred_check_branch
      %105 = sbr.rel (%p103) target = $region25
    $region24: #{tpu_custom_call.1} parent=1 // pred_region
      %v106 = vld [vmem:[#allocation2] sm:$0xff]
      %107 = vadd.xlane.f32.xlu0 %v106
      %v108 = vpop.xlane.xlu0 %107
      %v109 = vrot.slane %v108, 4
      %v110 = vadd.f32 %v108, %v109
      %v111 = vrot.slane %v110, 2
      %v112 = vadd.f32 %v110, %v111
      %v113 = vrot.slane %v112, 1
      %v114 = vadd.f32 %v112, %v113
      %s115 = vtos %v114
      %s116 = scalar_lea.smem [#allocation8], 0
      %117 = sst [smem:[%s116]] %s115
    $region25: #{tpu_custom_call.1} parent=1 // pred_fallthru
      _
    // Predicated region
    $region26: #{tpu_custom_call.1} parent=1 // pred_check
      _
    $region27: #{tpu_custom_call.1} parent=1 // pred_check_branch
      %119 = sbr.rel (0) target = $region29
    $region28: #{tpu_custom_call.1} parent=1 // pred_region
      %s121 = ssub.s32 16, 16
      %122 = vsyncadd [#allocation5], %s121
      %125 = dma.smem_to_hbm [#allocation8], 16, %s2, [#allocation5]
    $region29: #{tpu_custom_call.1} parent=1 // pred_fallthru
      _
    // Predicated region
    $region30: #{tpu_custom_call.1} parent=1 // pred_check
      _
    $region31: #{tpu_custom_call.1} parent=1 // pred_check_branch
      %127 = sbr.rel (0) target = $region33
    $region32: #{tpu_custom_call.1} parent=1 // pred_region
      %128 = dma.done [#allocation5], 16
    $region33: #{tpu_custom_call.1} parent=1 // pred_fallthru
      _
    %129 = sfence
    %130 = vsyncpa [#allocation4], 1
    %131 = vsyncpa [#allocation7], 1
    %132 = vsyncpa [#allocation5], 1

</llo_original>
